<compile_context>
chip_gen: v7x
topology: tpu7x:2x2x1
jax: 0.10.0
libtpu: 0.0.40
codegen_flags: <defaults>
</compile_context>

<pallas_src>
import jax
import jax.numpy as jnp
from jax import lax
from jax.experimental import pallas as pl
from jax.experimental.pallas import tpu as pltpu


def residual_kernel(x_ref, halo_ref, w1_ref, b1_ref, w2_ref, b2_ref, o_ref):
    # x_ref   : (C, TILE_L)  f32, channel-major (L on lanes)
    # halo_ref: (C, 2)       f32, raw x columns at [tile_start-1, tile_end] (0 = pad)
    # w1_ref  : (3H, C)      conv1 taps stacked on rows [k=0 | k=1 | k=2]
    # b1_ref  : (H, 1)       f32
    # w2_ref  : (Cout, H)
    # b2_ref  : (Cout, 1)    f32
    # o_ref   : (Cout, TILE_L)
    TL = x_ref.shape[1]
    H = b1_ref.shape[0]

    x = x_ref[...]                          # (C, TL)
    xr = jnp.maximum(x, 0.0)                # relu_1

    w1 = w1_ref[...]                        # (3H, C), matmul dtype (f32 or bf16)
    mm_dtype = w1.dtype

    # conv1: all three taps in one MXU matmul, f32 accumulation.
    m = jnp.dot(w1, xr.astype(mm_dtype), preferred_element_type=jnp.float32)   # (3H, TL)
    m0 = m[:H, :]            # tap k=0 applied at column l -> contributes to output l+1
    m1 = m[H:2 * H, :]       # tap k=1 -> output l
    m2 = m[2 * H:, :]        # tap k=2 applied at column l -> contributes to output l-1

    # Halo columns: relu then contract with the taps; only the k=0 row-block of the
    # left column and the k=2 row-block of the right column are used.
    hr = jnp.maximum(halo_ref[...], 0.0)                                        # (C, 2)
    hc = jnp.dot(w1, hr.astype(mm_dtype), preferred_element_type=jnp.float32)   # (3H, 2)
    left = hc[:H, 0:1]        # k=0 tap @ x[:, tile_start-1]  -> fills output column 0
    right = hc[2 * H:, 1:2]   # k=2 tap @ x[:, tile_end]      -> fills output column TL-1

    # Shift the k=0 / k=2 slabs by +/-1 along L; the halo contributions complete the
    # boundary columns, so there is no wraparound and no masking.
    sh0 = jnp.concatenate([left, m0[:, :TL - 1]], axis=1)    # sh0[:, l] = m0[:, l-1]
    sh2 = jnp.concatenate([m2[:, 1:], right], axis=1)        # sh2[:, l] = m2[:, l+1]

    y = m1 + sh0 + sh2 + b1_ref[...]                          # conv_1 + bias  (H, TL)
    h = jnp.maximum(y, 0.0)                                    # relu_2

    w2 = w2_ref[...]                                           # (Cout, H)
    z = jnp.dot(w2, h.astype(w2.dtype), preferred_element_type=jnp.float32) + b2_ref[...]
    o_ref[...] = (x + z).astype(o_ref.dtype)                   # residual add (un-ReLU'd x)


def _pick_tile_l(L, max_tile=512):
    """Largest 128-multiple tile <= max_tile dividing L (or the whole L).

    max_tile=512 keeps the per-step buffers (2x double-buffered x/out tiles plus the
    (3H, TILE_L) intermediate) in the low-MB range even for wide channels, safely
    inside v7x's 64 MiB VMEM and v5e's 16 MiB scoped default.
    """
    if L <= max_tile:
        return L
    for t in range(max_tile, 0, -128):
        if L % t == 0:
            return t
    return L


def residual_forward(x_ncl, w1, b1, w2, b2, *, tile_l=None, matmul_dtype=jnp.float32):
    """x_ncl: (B, C, L) f32.  w1: (H, C, 3), b1: (H,), w2: (Cout, H, 1), b2: (Cout,)."""
    B, C, L = x_ncl.shape
    H = w1.shape[0]
    Cout = w2.shape[0]
    assert Cout == C, "residual add requires num_hiddens == in_channels"

    if tile_l is None:
        tile_l = _pick_tile_l(L)
    if L % tile_l != 0:
        raise ValueError(f"L={L} must be divisible by tile_l={tile_l}")
    nt = L // tile_l

    # Weight repack for channel-major matmuls (done once, tiny):
    #   conv1 (O=H, I=C, K=3) -> (3H, C) with row k*H + h = w1[h, :, k]
    w1_cat = jnp.transpose(w1, (2, 0, 1)).reshape(3 * H, C).astype(matmul_dtype)
    w2_m = w2[:, :, 0].astype(matmul_dtype)                      # (Cout, H)
    b1_2d = b1.reshape(H, 1).astype(jnp.float32)
    b2_2d = b2.reshape(Cout, 1).astype(jnp.float32)

    # Halo columns for the k=3 conv at L-tile boundaries, shape (B, NT, C, 2):
    #   [..., 0] = x[:, :, j*tile_l - 1]   (zeros for j=0     -> conv left zero-pad)
    #   [..., 1] = x[:, :, (j+1)*tile_l]   (zeros for j=NT-1  -> conv right zero-pad)
    # This is 2/tile_l of the activation volume; it lets L-tiles stay non-overlapping
    # (plain Blocked BlockSpecs) while keeping the conv exact across tile boundaries.
    zcol = jnp.zeros((B, C, 1), x_ncl.dtype)
    left = jnp.concatenate([zcol, x_ncl[:, :, tile_l - 1:L - 1:tile_l]], axis=2)   # (B,C,NT)
    right = jnp.concatenate([x_ncl[:, :, tile_l::tile_l], zcol], axis=2)           # (B,C,NT)
    halo = jnp.stack([left, right], axis=-1).transpose(0, 2, 1, 3)                 # (B,NT,C,2)

    flops = 2 * B * L * (3 * C * H + H * Cout)
    bytes_accessed = (x_ncl.size + B * Cout * L + halo.size) * 4 \
        + (w1_cat.size + w2_m.size) * jnp.dtype(matmul_dtype).itemsize \
        + (H + Cout) * 4

    return pl.pallas_call(
        residual_kernel,
        out_shape=jax.ShapeDtypeStruct((B, Cout, L), x_ncl.dtype),
        grid=(B, nt),
        in_specs=[
            # Activations stream: one (C, tile_l) slab per grid step.
            pl.BlockSpec((None, C, tile_l), lambda b, j: (b, 0, j)),
            # Per-tile halo columns.
            pl.BlockSpec((None, None, C, 2), lambda b, j: (b, j, 0, 0)),
            # Weights / biases: constant index_maps -> fetched once, VMEM-resident.
            pl.BlockSpec((3 * H, C), lambda b, j: (0, 0)),
            pl.BlockSpec((H, 1), lambda b, j: (0, 0)),
            pl.BlockSpec((Cout, H), lambda b, j: (0, 0)),
            pl.BlockSpec((Cout, 1), lambda b, j: (0, 0)),
        ],
        out_specs=pl.BlockSpec((None, Cout, tile_l), lambda b, j: (b, 0, j)),
        compiler_params=pltpu.CompilerParams(
            # No cross-step carry -> both axes can shard across v7x's 2 TensorCores.
            dimension_semantics=("parallel", "parallel"),
            vmem_limit_bytes=32 * 1024 * 1024,
        ),
        cost_estimate=pl.CostEstimate(
            flops=flops, transcendentals=0, bytes_accessed=bytes_accessed),
    )(x_ncl, halo, w1_cat, b1_2d, w2_m, b2_2d)


def residual_reference(x_ncl, w1, b1, w2, b2):
    """Pure-JAX reference matching torch Conv1d (NCL / OIL)."""
    xr = jnp.maximum(x_ncl, 0.0)
    y = lax.conv_general_dilated(
        xr, w1, window_strides=(1,), padding=[(1, 1)],
        dimension_numbers=("NCH", "OIH", "NCH")) + b1[None, :, None]
    h = jnp.maximum(y, 0.0)
    z = lax.conv_general_dilated(
        h, w2, window_strides=(1,), padding=[(0, 0)],
        dimension_numbers=("NCH", "OIH", "NCH")) + b2[None, :, None]
    return x_ncl + z


if __name__ == "__main__":
    # module config: in_channels == num_hiddens (required by the residual add)
    B, C, L = 2, 32, 256         # batch, in_channels / num_hiddens, seq length
    H = 16                       # num_residual_hiddens

    key = jax.random.PRNGKey(0)
    kx, k1, kb1, k2, kb2 = jax.random.split(key, 5)
    x = jax.random.normal(kx, (B, C, L), dtype=jnp.float32)
    w1 = jax.random.normal(k1, (H, C, 3), dtype=jnp.float32) * 0.1   # conv1 weight (O, I, K)
    b1 = jax.random.normal(kb1, (H,), dtype=jnp.float32) * 0.1
    w2 = jax.random.normal(k2, (C, H, 1), dtype=jnp.float32) * 0.1   # conv2 weight (O, I, K)
    b2 = jax.random.normal(kb2, (C,), dtype=jnp.float32) * 0.1

    ref = jax.block_until_ready(residual_reference(x, w1, b1, w2, b2))

    # tile_l=128 -> 2x2 grid: exercises L-tiling, the halo path, and lane-dense stores.
    out = jax.block_until_ready(
        residual_forward(x, w1, b1, w2, b2, tile_l=128, matmul_dtype=jnp.float32))
    assert out.shape == (B, C, L)
    err = float(jnp.max(jnp.abs(out - ref)))
    assert err < 1e-4, f"f32 kernel mismatch vs reference (max abs err {err})"

    # bf16 MXU operands (production setting on all generations); f32 accumulation,
    # f32 elementwise -> only matmul-input rounding, checked at a loose tolerance.
    out_bf16 = jax.block_until_ready(
        residual_forward(x, w1, b1, w2, b2, tile_l=128, matmul_dtype=jnp.bfloat16))
    err_bf16 = float(jnp.max(jnp.abs(out_bf16 - ref)))
    assert err_bf16 < 5e-2, f"bf16 kernel mismatch vs reference (max abs err {err_bf16})"

    print("KERNEL_OK")
</pallas_src>

<mosaic_0001>
module attributes {stable_mosaic.version = 11 : i64} {
  func.func @residual_kernel(%arg0: i32, %arg1: i32, %arg2: memref<1x32x128xf32, #tpu.memory_space<vmem>>, %arg3: memref<1x1x32x2xf32, #tpu.memory_space<vmem>>, %arg4: memref<48x32xf32, #tpu.memory_space<vmem>>, %arg5: memref<16x1xf32, #tpu.memory_space<vmem>>, %arg6: memref<32x16xf32, #tpu.memory_space<vmem>>, %arg7: memref<32x1xf32, #tpu.memory_space<vmem>>, %arg8: memref<1x32x128xf32, #tpu.memory_space<vmem>>) attributes {dimension_semantics = [#tpu.dimension_semantics<parallel>, #tpu.dimension_semantics<parallel>], iteration_bounds = array<i64: 2, 2>, scalar_prefetch = 0 : i64, scratch_operands = 0 : i64, tpu.core_type = #tpu.core_type<tc>, window_params = [{transform_indices = @transform_0, window_bounds = array<i64: 1, 32, 128>}, {transform_indices = @transform_1, window_bounds = array<i64: 1, 1, 32, 2>}, {pipeline_mode = #tpu.pipeline_mode<synchronous>, transform_indices = @transform_2, window_bounds = array<i64: 48, 32>}, {pipeline_mode = #tpu.pipeline_mode<synchronous>, transform_indices = @transform_3, window_bounds = array<i64: 16, 1>}, {pipeline_mode = #tpu.pipeline_mode<synchronous>, transform_indices = @transform_4, window_bounds = array<i64: 32, 16>}, {pipeline_mode = #tpu.pipeline_mode<synchronous>, transform_indices = @transform_5, window_bounds = array<i64: 32, 1>}, {transform_indices = @transform_6, window_bounds = array<i64: 1, 32, 128>}]} {
    %c0 = arith.constant 0 : index
    %c0_0 = arith.constant 0 : index
    %c0_1 = arith.constant 0 : index
    %0 = vector.load %arg2[%c0, %c0_0, %c0_1] : memref<1x32x128xf32, #tpu.memory_space<vmem>>, vector<1x32x128xf32>
    %1 = vector.shape_cast %0 : vector<1x32x128xf32> to vector<32x128xf32>
    %cst = arith.constant 0.000000e+00 : f32
    %2 = vector.broadcast %cst : f32 to vector<32x128xf32>
    %3 = arith.maximumf %1, %2 : vector<32x128xf32>
    %c0_2 = arith.constant 0 : index
    %c0_3 = arith.constant 0 : index
    %4 = vector.load %arg4[%c0_2, %c0_3] : memref<48x32xf32, #tpu.memory_space<vmem>>, vector<48x32xf32>
    %cst_4 = arith.constant dense<0.000000e+00> : vector<48x128xf32>
    %5 = tpu.matmul %4, %3, %cst_4 {dimension_numbers = #tpu.dot_dimension_numbers<[1], [0], [0], [1], [0, 0, 1, 1], [], []>} : vector<48x32xf32>, vector<32x128xf32>, vector<48x128xf32> -> vector<48x128xf32>
    %6 = vector.extract_strided_slice %5 {offsets = [0, 0], sizes = [16, 128], strides = [1, 1]} : vector<48x128xf32> to vector<16x128xf32>
    %7 = vector.extract_strided_slice %5 {offsets = [16, 0], sizes = [16, 128], strides = [1, 1]} : vector<48x128xf32> to vector<16x128xf32>
    %8 = vector.extract_strided_slice %5 {offsets = [32, 0], sizes = [16, 128], strides = [1, 1]} : vector<48x128xf32> to vector<16x128xf32>
    %c0_5 = arith.constant 0 : index
    %c0_6 = arith.constant 0 : index
    %c0_7 = arith.constant 0 : index
    %c0_8 = arith.constant 0 : index
    %9 = vector.load %arg3[%c0_5, %c0_6, %c0_7, %c0_8] : memref<1x1x32x2xf32, #tpu.memory_space<vmem>>, vector<1x1x32x2xf32>
    %10 = vector.shape_cast %9 : vector<1x1x32x2xf32> to vector<32x2xf32>
    %cst_9 = arith.constant 0.000000e+00 : f32
    %11 = vector.broadcast %cst_9 : f32 to vector<32x2xf32>
    %12 = arith.maximumf %10, %11 : vector<32x2xf32>
    %cst_10 = arith.constant dense<0.000000e+00> : vector<48x2xf32>
    %13 = tpu.matmul %4, %12, %cst_10 {dimension_numbers = #tpu.dot_dimension_numbers<[1], [0], [0], [1], [0, 0, 1, 1], [], []>} : vector<48x32xf32>, vector<32x2xf32>, vector<48x2xf32> -> vector<48x2xf32>
    %14 = vector.extract_strided_slice %13 {offsets = [0, 0], sizes = [16, 1], strides = [1, 1]} : vector<48x2xf32> to vector<16x1xf32>
    %15 = vector.extract_strided_slice %13 {offsets = [32, 1], sizes = [16, 1], strides = [1, 1]} : vector<48x2xf32> to vector<16x1xf32>
    %16 = vector.extract_strided_slice %6 {offsets = [0, 0], sizes = [16, 127], strides = [1, 1]} : vector<16x128xf32> to vector<16x127xf32>
    %17 = tpu.concatenate %14, %16 in 1 : vector<16x1xf32>, vector<16x127xf32> -> vector<16x128xf32>
    %18 = vector.extract_strided_slice %8 {offsets = [0, 1], sizes = [16, 127], strides = [1, 1]} : vector<16x128xf32> to vector<16x127xf32>
    %19 = tpu.concatenate %18, %15 in 1 : vector<16x127xf32>, vector<16x1xf32> -> vector<16x128xf32>
    %20 = arith.addf %7, %17 : vector<16x128xf32>
    %21 = arith.addf %20, %19 : vector<16x128xf32>
    %c0_11 = arith.constant 0 : index
    %c0_12 = arith.constant 0 : index
    %22 = vector.load %arg5[%c0_11, %c0_12] : memref<16x1xf32, #tpu.memory_space<vmem>>, vector<16x1xf32>
    %23 = vector.broadcast %22 : vector<16x1xf32> to vector<16x128xf32>
    %24 = arith.addf %21, %23 : vector<16x128xf32>
    %cst_13 = arith.constant 0.000000e+00 : f32
    %25 = vector.broadcast %cst_13 : f32 to vector<16x128xf32>
    %26 = arith.maximumf %24, %25 : vector<16x128xf32>
    %c0_14 = arith.constant 0 : index
    %c0_15 = arith.constant 0 : index
    %27 = vector.load %arg6[%c0_14, %c0_15] : memref<32x16xf32, #tpu.memory_space<vmem>>, vector<32x16xf32>
    %cst_16 = arith.constant dense<0.000000e+00> : vector<32x128xf32>
    %28 = tpu.matmul %27, %26, %cst_16 {dimension_numbers = #tpu.dot_dimension_numbers<[1], [0], [0], [1], [0, 0, 1, 1], [], []>} : vector<32x16xf32>, vector<16x128xf32>, vector<32x128xf32> -> vector<32x128xf32>
    %c0_17 = arith.constant 0 : index
    %c0_18 = arith.constant 0 : index
    %29 = vector.load %arg7[%c0_17, %c0_18] : memref<32x1xf32, #tpu.memory_space<vmem>>, vector<32x1xf32>
    %30 = vector.broadcast %29 : vector<32x1xf32> to vector<32x128xf32>
    %31 = arith.addf %28, %30 : vector<32x128xf32>
    %32 = arith.addf %1, %31 : vector<32x128xf32>
    %c0_19 = arith.constant 0 : index
    %c0_20 = arith.constant 0 : index
    %c0_21 = arith.constant 0 : index
    %33 = vector.load %arg8[%c0_19, %c0_20, %c0_21] : memref<1x32x128xf32, #tpu.memory_space<vmem>>, vector<1x32x128xf32>
    %34 = vector.shape_cast %33 : vector<1x32x128xf32> to vector<32x128xf32>
    %35 = vector.shape_cast %32 : vector<32x128xf32> to vector<1x32x128xf32>
    tpu.vector_store %arg8[%c0_19, %c0_20, %c0_21], %35 {strides = array<i32>} : memref<1x32x128xf32, #tpu.memory_space<vmem>>, vector<1x32x128xf32>,
    return
  }
  func.func @transform_0(%arg0: i32, %arg1: i32) -> (i32, i32, i32) {
    %c0_i32 = arith.constant 0 : i32
    %c0_i32_0 = arith.constant 0 : i32
    return %arg0, %c0_i32, %arg1 : i32, i32, i32
  }
  func.func @transform_1(%arg0: i32, %arg1: i32) -> (i32, i32, i32, i32) {
    %c0_i32 = arith.constant 0 : i32
    %c0_i32_0 = arith.constant 0 : i32
    %c0_i32_1 = arith.constant 0 : i32
    return %arg0, %arg1, %c0_i32, %c0_i32_0 : i32, i32, i32, i32
  }
  func.func @transform_2(%arg0: i32, %arg1: i32) -> (i32, i32) {
    %c0_i32 = arith.constant 0 : i32
    %c0_i32_0 = arith.constant 0 : i32
    %c0_i32_1 = arith.constant 0 : i32
    return %c0_i32, %c0_i32_0 : i32, i32
  }
  func.func @transform_3(%arg0: i32, %arg1: i32) -> (i32, i32) {
    %c0_i32 = arith.constant 0 : i32
    %c0_i32_0 = arith.constant 0 : i32
    %c0_i32_1 = arith.constant 0 : i32
    return %c0_i32, %c0_i32_0 : i32, i32
  }
  func.func @transform_4(%arg0: i32, %arg1: i32) -> (i32, i32) {
    %c0_i32 = arith.constant 0 : i32
    %c0_i32_0 = arith.constant 0 : i32
    %c0_i32_1 = arith.constant 0 : i32
    return %c0_i32, %c0_i32_0 : i32, i32
  }
  func.func @transform_5(%arg0: i32, %arg1: i32) -> (i32, i32) {
    %c0_i32 = arith.constant 0 : i32
    %c0_i32_0 = arith.constant 0 : i32
    %c0_i32_1 = arith.constant 0 : i32
    return %c0_i32, %c0_i32_0 : i32, i32
  }
  func.func @transform_6(%arg0: i32, %arg1: i32) -> (i32, i32, i32) {
    %c0_i32 = arith.constant 0 : i32
    %c0_i32_0 = arith.constant 0 : i32
    return %arg0, %c0_i32, %arg1 : i32, i32, i32
  }
}

</mosaic_0001>

<llo_original>
// kernel: tpu_custom_call.1
$region0: #{tpu_custom_call.1}
  #allocation0 [shape = 'u32[]', space=smem, size = 0x4, offset = 0x4, fixed_abs, tag = 'smem constant byte address 0x4 - core index']
  #allocation1 [shape = 'u32[144,128]{1,0:T(1,128)}', space=vmem, size = 0x12000, scoped, tag = 'internal scratch']
  %s0 = inlined_call_operand.vmem [shape: f32[2,32,256], index: 0, kind: input, shape index: {}]
  %s1 = inlined_call_operand.vmem [shape: f32[2,2,32,2], index: 1, kind: input, shape index: {}]
  %s2 = inlined_call_operand.vmem [shape: f32[48,32], index: 2, kind: input, shape index: {}]
  %s3 = inlined_call_operand.vmem [shape: f32[16,1], index: 3, kind: input, shape index: {}]
  %s4 = inlined_call_operand.vmem [shape: f32[32,16], index: 4, kind: input, shape index: {}]
  %s5 = inlined_call_operand.vmem [shape: f32[32,1], index: 5, kind: input, shape index: {}]
  %s6 = inlined_call_operand.hbm [shape: f32[2,32,256], index: 6, kind: output, shape index: {}]
  %s7 = sld [smem:[#allocation0]]
  $region95: #{tpu_custom_call.1} parent=0
    _
  %s9 = ssub.s32 1, %s7
  %s10 = scalar_select 0, %s9, %s7
  $region1: #{tpu_custom_call.1} parent=0
    #allocation2 [shape = 'u8[32768]{0}', space=vmem, size = 0x8000, scoped, tag = 'input window, operand 0']
    #allocation3 [shape = 'u8[32768]{0}', space=vmem, size = 0x8000, scoped, tag = 'output window, operand 0']
    #allocation4 [shape = 's32[2]{0}', space=sflag, size = 0x8, scoped, tag = 'scoped memory for tpu_custom_call.1']
    %11 = vsyncpa [#allocation4], 0
    %s12 = scalar_lea.sflag [#allocation4], 1
    %13 = vsyncpa %s12, 0
    loop: start=0, step=1, limit=6
    $region2: #{tpu_custom_call.1} parent=1 // loop_pre_header
      _
    $region3: #{tpu_custom_call.1} parent=1 // loop_header
      %s15 = sphi 0, %s19
      %p16 = scmp.ge.s32.totalorder %s15, 6
      %s22 = sphi 0, %s34
      %s23 = sphi 0, %s30
      %s24 = sphi 0, %s22
      %s25 = sphi 0, %s23
      %s26 = sphi 0, %s24
      %s27 = sphi 0, %s25
      %s39 = sphi 0, %s41
      %s42 = sphi 0, %s39
      %s43 = sphi 0, %s42
      %s59 = sphi 0, %s43
      %s67 = sphi 0, %s69
      %s70 = sphi 0, %s67
      %s71 = sphi 0, %s70
      %s87 = sphi 0, %s71
      %s91 = sphi 0, %s91
      %s93 = sphi 0, %s91
      %s94 = sphi 0, %s93
      %s108 = sphi 0, %s94
      %s112 = sphi 0, %s112
      %s114 = sphi 0, %s112
      %s115 = sphi 0, %s114
      %s129 = sphi 0, %s115
      %s133 = sphi 0, %s133
      %s135 = sphi 0, %s133
      %s136 = sphi 0, %s135
      %s150 = sphi 0, %s136
      %s154 = sphi 0, %s154
      %s156 = sphi 0, %s154
      %s157 = sphi 0, %s156
      %s171 = sphi 0, %s157
      %s179 = sphi 0, %s181
      %s182 = sphi 0, %s179
      %s183 = sphi 0, %s182
      %s199 = sphi 0, %s183
    $region4: #{tpu_custom_call.1} parent=1 // loop_header_branch
      %18 = sbr.rel (%p16) target = $region8
    $region5: #{tpu_custom_call.1} parent=1 // loop_body
      %s20 = ssub.s32 %s15, 1
      %s21 = ssub.s32 %s15, 2
      %s28 = sadd.s32 1, %s23
      %p29 = scmp.ge.s32.totalorder %s28, 2
      %s30 = scalar_select %p29, 0, %s28
      %s31 = sadd.s32 1, %s22
      %s32 = scalar_select %p29, %s31, %s22
      %p33 = scmp.ge.s32.totalorder %s32, 2
      %s34 = scalar_select %p33, 0, %s32
      %s35 = ssub.s32 %s22, %s34
      %s36 = ssub.s32 %s23, %s30
      %s37 = sor.u32 %s35, %s36
      %p38 = scmp.eq.s32.totalorder %s37, 0
      %s40 = sadd.s32 %s39, 1
      %s41 = scalar_select %p38, %s39, %s40
      %p44 = pneg %p38
      %p45 = scmp.eq.s32.totalorder %s15, 3
      %p46 = por %p44, %p45
      %p47 = scmp.ne.s32.totalorder %s39, %s42
      %p48 = scmp.eq.s32.totalorder %s15, 0
      %p49 = por %p47, %p48
      %p50 = scmp.ne.s32.totalorder %s39, %s42
      %p51 = scmp.eq.s32.totalorder %s20, 3
      %p52 = por %p50, %p51
      %p53 = scmp.ne.s32.totalorder %s42, %s43
      %p54 = scmp.eq.s32.totalorder %s20, 0
      %p55 = por %p53, %p54
      %p56 = scmp.ne.s32.totalorder %s42, %s43
      %p57 = scmp.eq.s32.totalorder %s21, 3
      %p58 = por %p56, %p57
      %p60 = scmp.ne.s32.totalorder %s43, %s59
      %p61 = scmp.eq.s32.totalorder %s21, 0
      %p62 = por %p60, %p61
      %s63 = ssub.s32 %s22, %s34
      %s64 = ssub.s32 %s23, %s30
      %s65 = sor.u32 %s63, %s64
      %p66 = scmp.eq.s32.totalorder %s65, 0
      %s68 = sadd.s32 %s67, 1
      %s69 = scalar_select %p66, %s67, %s68
      %p72 = pneg %p66
      %p73 = scmp.eq.s32.totalorder %s15, 3
      %p74 = por %p72, %p73
      %p75 = scmp.ne.s32.totalorder %s67, %s70
      %p76 = scmp.eq.s32.totalorder %s15, 0
      %p77 = por %p75, %p76
      %p78 = scmp.ne.s32.totalorder %s67, %s70
      %p79 = scmp.eq.s32.totalorder %s20, 3
      %p80 = por %p78, %p79
      %p81 = scmp.ne.s32.totalorder %s70, %s71
      %p82 = scmp.eq.s32.totalorder %s20, 0
      %p83 = por %p81, %p82
      %p84 = scmp.ne.s32.totalorder %s70, %s71
      %p85 = scmp.eq.s32.totalorder %s21, 3
      %p86 = por %p84, %p85
      %p88 = scmp.ne.s32.totalorder %s71, %s87
      %p89 = scmp.eq.s32.totalorder %s21, 0
      %p90 = por %p88, %p89
      %s92 = sadd.s32 %s91, 1
      %p95 = scmp.eq.s32.totalorder %s15, 3
      %p96 = scmp.ne.s32.totalorder %s91, %s93
      %p97 = scmp.eq.s32.totalorder %s15, 0
      %p98 = por %p96, %p97
      %p99 = scmp.ne.s32.totalorder %s91, %s93
      %p100 = scmp.eq.s32.totalorder %s20, 3
      %p101 = por %p99, %p100
      %p102 = scmp.ne.s32.totalorder %s93, %s94
      %p103 = scmp.eq.s32.totalorder %s20, 0
      %p104 = por %p102, %p103
      %p105 = scmp.ne.s32.totalorder %s93, %s94
      %p106 = scmp.eq.s32.totalorder %s21, 3
      %p107 = por %p105, %p106
      %p109 = scmp.ne.s32.totalorder %s94, %s108
      %p110 = scmp.eq.s32.totalorder %s21, 0
      %p111 = por %p109, %p110
      %s113 = sadd.s32 %s112, 1
      %p116 = scmp.eq.s32.totalorder %s15, 3
      %p117 = scmp.ne.s32.totalorder %s112, %s114
      %p118 = scmp.eq.s32.totalorder %s15, 0
      %p119 = por %p117, %p118
      %p120 = scmp.ne.s32.totalorder %s112, %s114
      %p121 = scmp.eq.s32.totalorder %s20, 3
      %p122 = por %p120, %p121
      %p123 = scmp.ne.s32.totalorder %s114, %s115
      %p124 = scmp.eq.s32.totalorder %s20, 0
      %p125 = por %p123, %p124
      %p126 = scmp.ne.s32.totalorder %s114, %s115
      %p127 = scmp.eq.s32.totalorder %s21, 3
      %p128 = por %p126, %p127
      %p130 = scmp.ne.s32.totalorder %s115, %s129
      %p131 = scmp.eq.s32.totalorder %s21, 0
      %p132 = por %p130, %p131
      %s134 = sadd.s32 %s133, 1
      %p137 = scmp.eq.s32.totalorder %s15, 3
      %p138 = scmp.ne.s32.totalorder %s133, %s135
      %p139 = scmp.eq.s32.totalorder %s15, 0
      %p140 = por %p138, %p139
      %p141 = scmp.ne.s32.totalorder %s133, %s135
      %p142 = scmp.eq.s32.totalorder %s20, 3
      %p143 = por %p141, %p142
      %p144 = scmp.ne.s32.totalorder %s135, %s136
      %p145 = scmp.eq.s32.totalorder %s20, 0
      %p146 = por %p144, %p145
      %p147 = scmp.ne.s32.totalorder %s135, %s136
      %p148 = scmp.eq.s32.totalorder %s21, 3
      %p149 = por %p147, %p148
      %p151 = scmp.ne.s32.totalorder %s136, %s150
      %p152 = scmp.eq.s32.totalorder %s21, 0
      %p153 = por %p151, %p152
      %s155 = sadd.s32 %s154, 1
      %p158 = scmp.eq.s32.totalorder %s15, 3
      %p159 = scmp.ne.s32.totalorder %s154, %s156
      %p160 = scmp.eq.s32.totalorder %s15, 0
      %p161 = por %p159, %p160
      %p162 = scmp.ne.s32.totalorder %s154, %s156
      %p163 = scmp.eq.s32.totalorder %s20, 3
      %p164 = por %p162, %p163
      %p165 = scmp.ne.s32.totalorder %s156, %s157
      %p166 = scmp.eq.s32.totalorder %s20, 0
      %p167 = por %p165, %p166
      %p168 = scmp.ne.s32.totalorder %s156, %s157
      %p169 = scmp.eq.s32.totalorder %s21, 3
      %p170 = por %p168, %p169
      %p172 = scmp.ne.s32.totalorder %s157, %s171
      %p173 = scmp.eq.s32.totalorder %s21, 0
      %p174 = por %p172, %p173
      %s175 = ssub.s32 %s22, %s34
      %s176 = ssub.s32 %s23, %s30
      %s177 = sor.u32 %s175, %s176
      %p178 = scmp.eq.s32.totalorder %s177, 0
      %s180 = sadd.s32 %s179, 1
      %s181 = scalar_select %p178, %s179, %s180
      %p184 = pneg %p178
      %p185 = scmp.eq.s32.totalorder %s15, 3
      %p186 = por %p184, %p185
      %p187 = scmp.ne.s32.totalorder %s179, %s182
      %p188 = scmp.eq.s32.totalorder %s15, 0
      %p189 = por %p187, %p188
      %p190 = scmp.ne.s32.totalorder %s179, %s182
      %p191 = scmp.eq.s32.totalorder %s20, 3
      %p192 = por %p190, %p191
      %p193 = scmp.ne.s32.totalorder %s182, %s183
      %p194 = scmp.eq.s32.totalorder %s20, 0
      %p195 = por %p193, %p194
      %p196 = scmp.ne.s32.totalorder %s182, %s183
      %p197 = scmp.eq.s32.totalorder %s21, 3
      %p198 = por %p196, %p197
      %p200 = scmp.ne.s32.totalorder %s183, %s199
      %p201 = scmp.eq.s32.totalorder %s21, 0
      %p202 = por %p200, %p201
      %p203 = scmp.le.s32.totalorder 1, %s15
      %p204 = scmp.lt.s32.totalorder %s15, 5
      %p205 = pnand %p203, %p204
      %p206 = pneg %p205
      // Predicated region
      $region9: #{tpu_custom_call.1} parent=5 // pred_check
        _
      $region10: #{tpu_custom_call.1} parent=5 // pred_check_branch
        %208 = sbr.rel (%p205) target = $region12
      $region11: #{tpu_custom_call.1} parent=5 // pred_region
        %s209 = ssub.s32 %s15, 1
        // Predicated region
        $region13: #{tpu_custom_call.1} parent=11 // pred_check
          %p210 = pneg %p104
        $region14: #{tpu_custom_call.1} parent=11 // pred_check_branch
          %212 = sbr.rel (%p210) target = $region16
        $region15: #{tpu_custom_call.1} parent=11 // pred_region
          _
        $region16: #{tpu_custom_call.1} parent=11 // pred_fallthru
          _
        // Predicated region
        $region17: #{tpu_custom_call.1} parent=11 // pred_check
          %p213 = pneg %p125
        $region18: #{tpu_custom_call.1} parent=11 // pred_check_branch
          %215 = sbr.rel (%p213) target = $region20
        $region19: #{tpu_custom_call.1} parent=11 // pred_region
          _
        $region20: #{tpu_custom_call.1} parent=11 // pred_fallthru
          _
        // Predicated region
        $region21: #{tpu_custom_call.1} parent=11 // pred_check
          %p216 = pneg %p146
        $region22: #{tpu_custom_call.1} parent=11 // pred_check_branch
          %218 = sbr.rel (%p216) target = $region24
        $region23: #{tpu_custom_call.1} parent=11 // pred_region
          _
        $region24: #{tpu_custom_call.1} parent=11 // pred_fallthru
          _
        // Predicated region
        $region25: #{tpu_custom_call.1} parent=11 // pred_check
          %p219 = pneg %p167
        $region26: #{tpu_custom_call.1} parent=11 // pred_check_branch
          %221 = sbr.rel (%p219) target = $region28
        $region27: #{tpu_custom_call.1} parent=11 // pred_region
          _
        $region28: #{tpu_custom_call.1} parent=11 // pred_fallthru
          _
      $region12: #{tpu_custom_call.1} parent=5 // pred_fallthru
        _
      %p222 = scmp.lt.s32.totalorder %s15, 4
      // Predicated region
      $region29: #{tpu_custom_call.1} parent=5 // pred_check
        %p223 = pneg %p222
      $region30: #{tpu_custom_call.1} parent=5 // pred_check_branch
        %225 = sbr.rel (%p223) target = $region32
      $region31: #{tpu_custom_call.1} parent=5 // pred_region
        // Predicated region
        $region33: #{tpu_custom_call.1} parent=31 // pred_check
          %p226 = pneg %p49
        $region34: #{tpu_custom_call.1} parent=31 // pred_check_branch
          %228 = sbr.rel (%p226) target = $region36
        $region35: #{tpu_custom_call.1} parent=31 // pred_region
          %s229 = sand.u32 %s39, 1
          %s230 = sand.u32 %s39, 1
          %s231 = smul.addr %s230, 32
          %s232 = scalar_lea.vmem [#allocation2], %s231
          %s233 = smul.addr %s22, 8
          %s234 = sadd.s32 %s23, %s233
          %s235 = smul.addr %s234, 8
          %s236 = scalar_lea.vmem %s0, %s235
          // Predicated region
          $region37: #{tpu_custom_call.1} parent=35 // pred_check
            _
          $region38: #{tpu_custom_call.1} parent=35 // pred_check_branch
            %238 = sbr.rel (0) target = $region40
          $region39: #{tpu_custom_call.1} parent=35 // pred_region
            // Predicated region
            $region41: #{tpu_custom_call.1} parent=39 // pred_check
              _
            $region42: #{tpu_custom_call.1} parent=39 // pred_check_branch
              %240 = sbr.rel (0) target = $region44
            $region43: #{tpu_custom_call.1} parent=39 // pred_region
              // Predicated region
              $region56: #{tpu_custom_call.1} parent=43 // pred_check
                _
              $region57: #{tpu_custom_call.1} parent=43 // pred_check_branch
                %261 = sbr.rel (0) target = $region59
              $region58: #{tpu_custom_call.1} parent=43 // pred_region
                loop: start=0, step=1, limit=1
                $region60: #{tpu_custom_call.1} parent=58 // loop_pre_header
                  _
                $region61: #{tpu_custom_call.1} parent=58 // loop_header
                  %s263 = sphi 0, %s267
                  %p264 = scmp.ge.s32.totalorder %s263, 1
                  %s268 = sphi %s236, %s236
                  %s269 = sphi %s232, %s232
                $region62: #{tpu_custom_call.1} parent=58 // loop_header_branch
                  %266 = sbr.rel (%p264) target = $region66
                $region63: #{tpu_custom_call.1} parent=58 // loop_body
                  %v270 = vld [vmem:[%s268] sm:$0xff]
                  %271 = vst [vmem:[%s269] sm:$0xff] %v270
                  %v272 = vld [vmem:[%s268 + $0x10] sm:$0xff]
                  %273 = vst [vmem:[%s269 + $0x8] sm:$0xff] %v272
                  %v274 = vld [vmem:[%s268 + $0x20] sm:$0xff]
                  %275 = vst [vmem:[%s269 + $0x10] sm:$0xff] %v274
                  %v276 = vld [vmem:[%s268 + $0x30] sm:$0xff]
                  %277 = vst [vmem:[%s269 + $0x18] sm:$0xff] %v276
                $region64: #{tpu_custom_call.1} parent=58 // loop_footer
                  %s267 = sadd.s32 1, %s263
                $region65: #{tpu_custom_call.1} parent=58 // loop_footer_branch
                  %262 = sbr.rel target = $region61
                $region66: #{tpu_custom_call.1} parent=58 // loop_exit
                  _
              $region59: #{tpu_custom_call.1} parent=43 // pred_fallthru
                _
              // Predicated region
              $region67: #{tpu_custom_call.1} parent=43 // pred_check
                _
              $region68: #{tpu_custom_call.1} parent=43 // pred_check_branch
                %279 = sbr.rel target = $region70
              $region69: #{tpu_custom_call.1} parent=43 // pred_region
                _
              $region70: #{tpu_custom_call.1} parent=43 // pred_fallthru
                _
            $region44: #{tpu_custom_call.1} parent=39 // pred_fallthru
              _
            // Predicated region
            $region45: #{tpu_custom_call.1} parent=39 // pred_check
              _
            $region46: #{tpu_custom_call.1} parent=39 // pred_check_branch
              %242 = sbr.rel target = $region48
            $region47: #{tpu_custom_call.1} parent=39 // pred_region
              loop: start=0, step=1, limit=1
              $region49: #{tpu_custom_call.1} parent=47 // loop_pre_header
                _
              $region50: #{tpu_custom_call.1} parent=47 // loop_header
                %s245 = sphi 0, %s249
                %p246 = scmp.ge.s32.totalorder %s245, 1
                %s250 = sphi %s236, %s236
                %s251 = sphi %s232, %s232
              $region51: #{tpu_custom_call.1} parent=47 // loop_header_branch
                %248 = sbr.rel (%p246) target = $region55
              $region52: #{tpu_custom_call.1} parent=47 // loop_body
                %v252 = vld [vmem:[%s250] sm:$0xff]
                %253 = vst [vmem:[%s251] sm:$0xff] %v252
                %v254 = vld [vmem:[%s250 + $0x10] sm:$0xff]
                %255 = vst [vmem:[%s251 + $0x8] sm:$0xff] %v254
                %v256 = vld [vmem:[%s250 + $0x20] sm:$0xff]
                %257 = vst [vmem:[%s251 + $0x10] sm:$0xff] %v256
                %v258 = vld [vmem:[%s250 + $0x30] sm:$0xff]
                %259 = vst [vmem:[%s251 + $0x18] sm:$0xff] %v258
              $region53: #{tpu_custom_call.1} parent=47 // loop_footer
                %s249 = sadd.s32 1, %s245
              $region54: #{tpu_custom_call.1} parent=47 // loop_footer_branch
                %244 = sbr.rel target = $region50
              $region55: #{tpu_custom_call.1} parent=47 // loop_exit
                _
            $region48: #{tpu_custom_call.1} parent=39 // pred_fallthru
              _
          $region40: #{tpu_custom_call.1} parent=35 // pred_fallthru
            _
          %280 = vnop
        $region36: #{tpu_custom_call.1} parent=31 // pred_fallthru
          _
        // Predicated region
        $region71: #{tpu_custom_call.1} parent=31 // pred_check
          %p281 = pneg %p77
        $region72: #{tpu_custom_call.1} parent=31 // pred_check_branch
          %283 = sbr.rel (%p281) target = $region74
        $region73: #{tpu_custom_call.1} parent=31 // pred_region
          %p284 = scmp.lt.s32.totalorder %s22, 1
          %s285 = scalar_select %p284, %s22, 1
          %p286 = scmp.lt.s32.totalorder %s23, 1
          %s287 = scalar_select %p286, %s23, 1
          %s288 = smul.addr %s287, 4
          %s289 = smul.addr %s285, 8
          %s290 = sadd.s32 %s288, %s289
          %s291 = smul.addr %s290, 8
          %s292 = scalar_lea.vmem %s1, %s291
        $region74: #{tpu_custom_call.1} parent=31 // pred_fallthru
          _
      $region32: #{tpu_custom_call.1} parent=5 // pred_fallthru
        _
      %p293 = scmp.le.s32.totalorder 1, %s15
      %p294 = scmp.lt.s32.totalorder %s15, 5
      %p295 = pnand %p293, %p294
      %p296 = pneg %p295
      // Predicated region
      $region75: #{tpu_custom_call.1} parent=5 // pred_check
        _
      $region76: #{tpu_custom_call.1} parent=5 // pred_check_branch
        %298 = sbr.rel (%p295) target = $region78
      $region77: #{tpu_custom_call.1} parent=5 // pred_region
        %s299 = ssub.s32 %s15, 1
        %s300 = sand.u32 %s42, 1
        %s301 = sand.u32 %s42, 1
        %s302 = smul.addr %s301, 32
        %s303 = scalar_lea.vmem [#allocation2], %s302
        // Predicated region
        $region79: #{tpu_custom_call.1} parent=77 // pred_check
          %p304 = pneg %p55
        $region80: #{tpu_custom_call.1} parent=77 // pred_check_branch
          %306 = sbr.rel (%p304) target = $region82
        $region81: #{tpu_custom_call.1} parent=77 // pred_region
          _
        $region82: #{tpu_custom_call.1} parent=77 // pred_fallthru
          _
        %s307 = sand.u32 %s42, 1
        %s308 = sand.u32 %s42, 1
        %s309 = smul.addr %s308, 32
        %s310 = scalar_lea.vmem [#allocation2], %s309
        %p311 = pneg %p55
        %p312 = pneg %p52
        %p313 = scmp.lt.s32.totalorder %s24, 1
        %s314 = scalar_select %p313, %s24, 1
        %p315 = scmp.lt.s32.totalorder %s25, 1
        %s316 = scalar_select %p315, %s25, 1
        %s317 = smul.addr %s316, 4
        %s318 = smul.addr %s314, 8
        %s319 = sadd.s32 %s317, %s318
        %s320 = smul.addr %s319, 8
        %s321 = scalar_lea.vmem %s1, %s320
        %p322 = pneg %p83
        %p323 = pneg %p80
        %p324 = pneg %p104
        %p325 = pneg %p101
        %p326 = pneg %p125
        %p327 = pneg %p122
        %p328 = pneg %p146
        %p329 = pneg %p143
        %p330 = pneg %p167
        %p331 = pneg %p164
        %p332 = pneg %p195
        %p333 = pneg %p192
        %s334 = sand.u32 %s182, 1
        %s335 = scalar_lea.sflag [#allocation4], %s334
        %s336 = sand.u32 %s182, 1
        %s337 = smul.addr %s336, 32
        %s338 = scalar_lea.vmem [#allocation3], %s337
        %p339 = scmp.lt.s32.totalorder %s24, 1
        %s340 = scalar_select %p339, %s24, 1
        %p341 = scmp.lt.s32.totalorder %s25, 1
        %s342 = scalar_select %p341, %s25, 1
        %s343 = smul.addr %s342, 4
        %s344 = smul.addr %s340, 8
        %s345 = sadd.s32 %s343, %s344
        %s346 = smul.addr %s345, 8
        %s347 = scalar_lea.vmem %s1, %s346
        %v348 = vld [vmem:[%s303] sm:$0xff]
        %v349 = vld [vmem:[%s303 + $0x8] sm:$0xff]
        %v350 = vld [vmem:[%s303 + $0x10] sm:$0xff]
        %v351 = vld [vmem:[%s303 + $0x18] sm:$0xff]
        %v352 = vmax.f32 %v348, 0.0
        %v353 = vmax.f32 %v349, 0.0
        %v354 = vmax.f32 %v350, 0.0
        %v355 = vmax.f32 %v351, 0.0
        %v356 = vld [vmem:[%s2] sm:$0xff]
        %v357 = vld [vmem:[%s2 + $0x8] sm:$0xff]
        %v358 = vld [vmem:[%s2 + $0x10] sm:$0xff]
        %v359 = vld [vmem:[%s2 + $0x18] sm:$0xff]
        %v360 = vld [vmem:[%s2 + $0x20] sm:$0xff]
        %v361 = vld [vmem:[%s2 + $0x28] sm:$0xff]
        %vm362 = vcmask 261120
        %v364 = vsel %vm362, %v356, 0
        %v367 = vsel %vm362, %v357, 0
        %v370 = vsel %vm362, %v358, 0
        %v373 = vsel %vm362, %v359, 0
        %v376 = vsel %vm362, %v360, 0
        %v379 = vsel %vm362, %v361, 0
        %381 = vmatprep.subr.mxu0 0.0
        %382 = vmatpush1.msra.mxu0 %v352
        %383 = vmatprep.subr.mxu0 0.0
        %384 = vmatpush1.msra.mxu0 %v353
        %385 = vmatprep.subr.mxu0 0.0
        %386 = vmatpush1.msra.mxu0 %v354
        %387 = vmatprep.subr.mxu0 0.0
        %388 = vmatpush1.msra.mxu0 %v355
        %389 = vmatprep.subr.mxu0 0.0
        %390 = vmatpush1.msra.mxu0 0.0
        %391 = vmatprep.subr.mxu0 0.0
        %392 = vmatpush1.msra.mxu0 0.0
        %393 = vmatprep.subr.mxu0 0.0
        %394 = vmatpush1.msra.mxu0 0.0
        %395 = vmatprep.subr.mxu0 0.0
        %396 = vmatpush1.msra.mxu0 0.0
        %397 = vmatprep.subr.mxu0 0.0
        %398 = vmatpush1.msra.mxu0 0.0
        %399 = vmatprep.subr.mxu0 0.0
        %400 = vmatpush1.msra.mxu0 0.0
        %401 = vmatprep.subr.mxu0 0.0
        %402 = vmatpush1.msra.mxu0 0.0
        %403 = vmatprep.subr.mxu0 0.0
        %404 = vmatpush1.msra.mxu0 0.0
        %405 = vmatprep.subr.mxu0 0.0
        %406 = vmatpush1.msra.mxu0 0.0
        %407 = vmatprep.subr.mxu0 0.0
        %408 = vmatpush1.msra.mxu0 0.0
        %409 = vmatprep.subr.mxu0 0.0
        %410 = vmatpush1.msra.mxu0 0.0
        %411 = vmatprep.subr.mxu0 0.0
        %412 = vmatpush1.msra.mxu0 0.0
        %413 = vmatprep.subr.mxu0 0.0
        %414 = vmatpush1.msra.mxu0 0.0
        %415 = vmatprep.subr.mxu0 0.0
        %416 = vmatpush1.msra.mxu0 0.0
        %417 = vmatprep.subr.mxu0 0.0
        %418 = vmatpush1.msra.mxu0 0.0
        %419 = vmatprep.subr.mxu0 0.0
        %420 = vmatpush1.msra.mxu0 0.0
        %421 = vmatprep.subr.mxu0 0.0
        %422 = vmatpush1.msra.mxu0 0.0
        %423 = vmatprep.subr.mxu0 0.0
        %424 = vmatpush1.msra.mxu0 0.0
        %425 = vmatprep.subr.mxu0 0.0
        %426 = vmatpush1.msra.mxu0 0.0
        %427 = vmatprep.subr.mxu0 0.0
        %428 = vmatpush1.msra.mxu0 0.0
        %429 = vmatprep.subr.mxu0 0.0
        %430 = vmatpush1.msra.mxu0 0.0
        %431 = vmatprep.subr.mxu0 0.0
        %432 = vmatpush1.msra.mxu0 0.0
        %433 = vmatprep.subr.mxu0 0.0
        %434 = vmatpush1.msra.mxu0 0.0
        %435 = vmatprep.subr.mxu0 0.0
        %436 = vmatpush1.msra.mxu0 0.0
        %437 = vmatprep.subr.mxu0 0.0
        %438 = vmatpush1.msra.mxu0 0.0
        %439 = vmatprep.subr.mxu0 0.0
        %440 = vmatpush1.msra.mxu0 0.0
        %441 = vmatprep.subr.mxu0 0.0
        %442 = vmatpush1.msra.mxu0 0.0
        %443 = vmatprep.subr.mxu0 0.0
        %444 = vmatpush1.msra.mxu0 0.0
        %445 = vmatprep.mubr.f32.mxu0 0.0
        %446 = vmatmul.mubr.f32.gmra.mrb[0].mxu0 %v364
        %v447 = vpop.f32.mrb[0].mxu0
        %v448 = vadd.f32 0.0, %v447
        %v449 = vpop.f32.mrb[0].mxu0
        %450 = vmatprep.mubr.f32.mxu0 0.0
        %451 = vmatmul.mubr.f32.gmra.mrb[0].mxu0 %v367
        %v452 = vpop.f32.mrb[0].mxu0
        %v453 = vadd.f32 0.0, %v452
        %v454 = vpop.f32.mrb[0].mxu0
        %455 = vmatprep.mubr.f32.mxu0 0.0
        %456 = vmatmul.mubr.f32.gmra.mrb[0].mxu0 %v370
        %v457 = vpop.f32.mrb[0].mxu0
        %v458 = vadd.f32 0.0, %v457
        %v459 = vpop.f32.mrb[0].mxu0
        %460 = vmatprep.mubr.f32.mxu0 0.0
        %461 = vmatmul.mubr.f32.gmra.mrb[0].mxu0 %v373
        %v462 = vpop.f32.mrb[0].mxu0
        %v463 = vadd.f32 0.0, %v462
        %v464 = vpop.f32.mrb[0].mxu0
        %465 = vmatprep.mubr.f32.mxu0 0.0
        %466 = vmatmul.mubr.f32.gmra.mrb[0].mxu0 %v376
        %v467 = vpop.f32.mrb[0].mxu0
        %v468 = vadd.f32 0.0, %v467
        %v469 = vpop.f32.mrb[0].mxu0
        %470 = vmatprep.mubr.f32.mxu0 0.0
        %471 = vmatmul.mubr.f32.gmra.mrb[0].mxu0 %v379
        %v472 = vpop.f32.mrb[0].mxu0
        %v473 = vadd.f32 0.0, %v472
        %v474 = vpop.f32.mrb[0].mxu0
        %475 = vdwg.mxu0
        %v476 = vld [vmem:[%s347] sm:$0xff]
        %v477 = vld [vmem:[%s347 + $0x8] sm:$0xff]
        %v478 = vld [vmem:[%s347 + $0x10] sm:$0xff]
        %v479 = vld [vmem:[%s347 + $0x18] sm:$0xff]
        %v480 = vmax.f32 %v476, 0.0
        %v481 = vmax.f32 %v477, 0.0
        %v482 = vmax.f32 %v478, 0.0
        %v483 = vmax.f32 %v479, 0.0
        %484 = vmatprep.subr.mxu0 0.0
        %485 = vmatpush1.msra.mxu0 %v480
        %486 = vmatprep.subr.mxu0 0.0
        %487 = vmatpush1.msra.mxu0 %v481
        %488 = vmatprep.subr.mxu0 0.0
        %489 = vmatpush1.msra.mxu0 %v482
        %490 = vmatprep.subr.mxu0 0.0
        %491 = vmatpush1.msra.mxu0 %v483
        %492 = vmatprep.subr.mxu0 0.0
        %493 = vmatpush1.msra.mxu0 0.0
        %494 = vmatprep.subr.mxu0 0.0
        %495 = vmatpush1.msra.mxu0 0.0
        %496 = vmatprep.subr.mxu0 0.0
        %497 = vmatpush1.msra.mxu0 0.0
        %498 = vmatprep.subr.mxu0 0.0
        %499 = vmatpush1.msra.mxu0 0.0
        %500 = vmatprep.subr.mxu0 0.0
        %501 = vmatpush1.msra.mxu0 0.0
        %502 = vmatprep.subr.mxu0 0.0
        %503 = vmatpush1.msra.mxu0 0.0
        %504 = vmatprep.subr.mxu0 0.0
        %505 = vmatpush1.msra.mxu0 0.0
        %506 = vmatprep.subr.mxu0 0.0
        %507 = vmatpush1.msra.mxu0 0.0
        %508 = vmatprep.subr.mxu0 0.0
        %509 = vmatpush1.msra.mxu0 0.0
        %510 = vmatprep.subr.mxu0 0.0
        %511 = vmatpush1.msra.mxu0 0.0
        %512 = vmatprep.subr.mxu0 0.0
        %513 = vmatpush1.msra.mxu0 0.0
        %514 = vmatprep.subr.mxu0 0.0
        %515 = vmatpush1.msra.mxu0 0.0
        %516 = vmatprep.subr.mxu0 0.0
        %517 = vmatpush1.msra.mxu0 0.0
        %518 = vmatprep.subr.mxu0 0.0
        %519 = vmatpush1.msra.mxu0 0.0
        %520 = vmatprep.subr.mxu0 0.0
        %521 = vmatpush1.msra.mxu0 0.0
        %522 = vmatprep.subr.mxu0 0.0
        %523 = vmatpush1.msra.mxu0 0.0
        %524 = vmatprep.subr.mxu0 0.0
        %525 = vmatpush1.msra.mxu0 0.0
        %526 = vmatprep.subr.mxu0 0.0
        %527 = vmatpush1.msra.mxu0 0.0
        %528 = vmatprep.subr.mxu0 0.0
        %529 = vmatpush1.msra.mxu0 0.0
        %530 = vmatprep.subr.mxu0 0.0
        %531 = vmatpush1.msra.mxu0 0.0
        %532 = vmatprep.subr.mxu0 0.0
        %533 = vmatpush1.msra.mxu0 0.0
        %534 = vmatprep.subr.mxu0 0.0
        %535 = vmatpush1.msra.mxu0 0.0
        %536 = vmatprep.subr.mxu0 0.0
        %537 = vmatpush1.msra.mxu0 0.0
        %538 = vmatprep.subr.mxu0 0.0
        %539 = vmatpush1.msra.mxu0 0.0
        %540 = vmatprep.subr.mxu0 0.0
        %541 = vmatpush1.msra.mxu0 0.0
        %542 = vmatprep.subr.mxu0 0.0
        %543 = vmatpush1.msra.mxu0 0.0
        %544 = vmatprep.subr.mxu0 0.0
        %545 = vmatpush1.msra.mxu0 0.0
        %546 = vmatprep.subr.mxu0 0.0
        %547 = vmatpush1.msra.mxu0 0.0
        %548 = vmatprep.mubr.f32.mxu0 0.0
        %549 = vmatmul.mubr.f32.gmra.mrb[0].mxu0 %v364
        %v550 = vpop.f32.mrb[0].mxu0
        %v551 = vadd.f32 0.0, %v550
        %v552 = vpop.f32.mrb[0].mxu0
        %553 = vmatprep.mubr.f32.mxu0 0.0
        %554 = vmatmul.mubr.f32.gmra.mrb[0].mxu0 %v367
        %v555 = vpop.f32.mrb[0].mxu0
        %v556 = vadd.f32 0.0, %v555
        %v557 = vpop.f32.mrb[0].mxu0
        %558 = vmatprep.mubr.f32.mxu0 0.0
        %559 = vmatmul.mubr.f32.gmra.mrb[0].mxu0 %v370
        %v560 = vpop.f32.mrb[0].mxu0
        %v561 = vpop.f32.mrb[0].mxu0
        %562 = vmatprep.mubr.f32.mxu0 0.0
        %563 = vmatmul.mubr.f32.gmra.mrb[0].mxu0 %v373
        %v564 = vpop.f32.mrb[0].mxu0
        %v565 = vpop.f32.mrb[0].mxu0
        %566 = vmatprep.mubr.f32.mxu0 0.0
        %567 = vmatmul.mubr.f32.gmra.mrb[0].mxu0 %v376
        %v568 = vpop.f32.mrb[0].mxu0
        %v569 = vadd.f32 0.0, %v568
        %v570 = vpop.f32.mrb[0].mxu0
        %571 = vmatprep.mubr.f32.mxu0 0.0
        %572 = vmatmul.mubr.f32.gmra.mrb[0].mxu0 %v379
        %v573 = vpop.f32.mrb[0].mxu0
        %v574 = vadd.f32 0.0, %v573
        %v575 = vpop.f32.mrb[0].mxu0
        %576 = vdwg.mxu0
        %579 = vrot.lane.b32.xlu0 %v448, 1
        %v580 = vpop.permute.xlu0 %579
        %581 = vrot.lane.b32.xlu0 %v453, 1
        %v582 = vpop.permute.xlu0 %581
        %vm585 = vcmask 7168
        %v586 = vsel %vm585, %v551, %v580
        %v587 = vsel %vm585, %v556, %v582
        %590 = vrot.lane.b32.xlu0 %v468, 127
        %v591 = vpop.permute.xlu0 %590
        %592 = vrot.lane.b32.xlu0 %v473, 127
        %v593 = vpop.permute.xlu0 %592
        %598 = vrot.lane.b32.xlu0 %v569, 126
        %v599 = vpop.permute.xlu0 %598
        %600 = vrot.lane.b32.xlu0 %v574, 126
        %v601 = vpop.permute.xlu0 %600
        %vm604 = vcmask 1039360
        %v605 = vsel %vm604, %v591, %v599
        %v606 = vsel %vm604, %v593, %v601
        %v607 = vadd.f32 %v458, %v586
        %v608 = vadd.f32 %v463, %v587
        %v609 = vadd.f32 %v607, %v605
        %v610 = vadd.f32 %v608, %v606
        %v611 = vld [vmem:[%s3] sm:$0xff]
        %v612 = vld [vmem:[%s3 + $0x8] sm:$0xff]
        %614 = vset.pattern.permute.xlu0 0
        %615 = vperm.xlu0 %614, %v611
        %v616 = vpop.permute.xlu0 %615
        %619 = vset.pattern.permute.xlu0 0
        %620 = vperm.xlu0 %619, %v612
        %v621 = vpop.permute.xlu0 %620
        %v623 = vadd.f32 %v609, %v616
        %v624 = vadd.f32 %v610, %v621
        %v625 = vmax.f32 %v623, 0.0
        %v626 = vmax.f32 %v624, 0.0
        %v627 = vld [vmem:[%s4] sm:$0xff]
        %v628 = vld [vmem:[%s4 + $0x8] sm:$0xff]
        %v629 = vld [vmem:[%s4 + $0x10] sm:$0xff]
        %v630 = vld [vmem:[%s4 + $0x18] sm:$0xff]
        %v631 = vld [vmem:[%s5] sm:$0xff]
        %v632 = vld [vmem:[%s5 + $0x8] sm:$0xff]
        %v633 = vld [vmem:[%s5 + $0x10] sm:$0xff]
        %v634 = vld [vmem:[%s5 + $0x18] sm:$0xff]
        %636 = vset.pattern.permute.xlu0 0
        %637 = vperm.xlu0 %636, %v631
        %v638 = vpop.permute.xlu0 %637
        %641 = vset.pattern.permute.xlu0 0
        %642 = vperm.xlu0 %641, %v632
        %v643 = vpop.permute.xlu0 %642
        %646 = vset.pattern.permute.xlu0 0
        %647 = vperm.xlu0 %646, %v633
        %v648 = vpop.permute.xlu0 %647
        %651 = vset.pattern.permute.xlu0 0
        %652 = vperm.xlu0 %651, %v634
        %v653 = vpop.permute.xlu0 %652
        %vm655 = vcmask 130048
        %v657 = vsel %vm655, %v627, 0
        %v660 = vsel %vm655, %v628, 0
        %v663 = vsel %vm655, %v629, 0
        %v666 = vsel %vm655, %v630, 0
        %668 = vmatprep.subr.mxu0 0.0
        %669 = vmatpush1.msra.mxu0 %v625
        %670 = vmatprep.subr.mxu0 0.0
        %671 = vmatpush1.msra.mxu0 %v626
        %672 = vmatprep.subr.mxu0 0.0
        %673 = vmatpush1.msra.mxu0 0.0
        %674 = vmatprep.subr.mxu0 0.0
        %675 = vmatpush1.msra.mxu0 0.0
        %676 = vmatprep.subr.mxu0 0.0
        %677 = vmatpush1.msra.mxu0 0.0
        %678 = vmatprep.subr.mxu0 0.0
        %679 = vmatpush1.msra.mxu0 0.0
        %680 = vmatprep.subr.mxu0 0.0
        %681 = vmatpush1.msra.mxu0 0.0
        %682 = vmatprep.subr.mxu0 0.0
        %683 = vmatpush1.msra.mxu0 0.0
        %684 = vmatprep.subr.mxu0 0.0
        %685 = vmatpush1.msra.mxu0 0.0
        %686 = vmatprep.subr.mxu0 0.0
        %687 = vmatpush1.msra.mxu0 0.0
        %688 = vmatprep.subr.mxu0 0.0
        %689 = vmatpush1.msra.mxu0 0.0
        %690 = vmatprep.subr.mxu0 0.0
        %691 = vmatpush1.msra.mxu0 0.0
        %692 = vmatprep.subr.mxu0 0.0
        %693 = vmatpush1.msra.mxu0 0.0
        %694 = vmatprep.subr.mxu0 0.0
        %695 = vmatpush1.msra.mxu0 0.0
        %696 = vmatprep.subr.mxu0 0.0
        %697 = vmatpush1.msra.mxu0 0.0
        %698 = vmatprep.subr.mxu0 0.0
        %699 = vmatpush1.msra.mxu0 0.0
        %700 = vmatprep.subr.mxu0 0.0
        %701 = vmatpush1.msra.mxu0 0.0
        %702 = vmatprep.subr.mxu0 0.0
        %703 = vmatpush1.msra.mxu0 0.0
        %704 = vmatprep.subr.mxu0 0.0
        %705 = vmatpush1.msra.mxu0 0.0
        %706 = vmatprep.subr.mxu0 0.0
        %707 = vmatpush1.msra.mxu0 0.0
        %708 = vmatprep.subr.mxu0 0.0
        %709 = vmatpush1.msra.mxu0 0.0
        %710 = vmatprep.subr.mxu0 0.0
        %711 = vmatpush1.msra.mxu0 0.0
        %712 = vmatprep.subr.mxu0 0.0
        %713 = vmatpush1.msra.mxu0 0.0
        %714 = vmatprep.subr.mxu0 0.0
        %715 = vmatpush1.msra.mxu0 0.0
        %716 = vmatprep.subr.mxu0 0.0
        %717 = vmatpush1.msra.mxu0 0.0
        %718 = vmatprep.subr.mxu0 0.0
        %719 = vmatpush1.msra.mxu0 0.0
        %720 = vmatprep.subr.mxu0 0.0
        %721 = vmatpush1.msra.mxu0 0.0
        %722 = vmatprep.subr.mxu0 0.0
        %723 = vmatpush1.msra.mxu0 0.0
        %724 = vmatprep.subr.mxu0 0.0
        %725 = vmatpush1.msra.mxu0 0.0
        %726 = vmatprep.subr.mxu0 0.0
        %727 = vmatpush1.msra.mxu0 0.0
        %728 = vmatprep.subr.mxu0 0.0
        %729 = vmatpush1.msra.mxu0 0.0
        %730 = vmatprep.subr.mxu0 0.0
        %731 = vmatpush1.msra.mxu0 0.0
        %732 = vmatprep.mubr.f32.mxu0 0.0
        %733 = vmatmul.mubr.f32.gmra.mrb[0].mxu0 %v657
        %v734 = vpop.f32.mrb[0].mxu0
        %v735 = vadd.f32 %v638, %v734
        %v736 = vpop.f32.mrb[0].mxu0
        %737 = vmatprep.mubr.f32.mxu0 0.0
        %738 = vmatmul.mubr.f32.gmra.mrb[0].mxu0 %v660
        %v739 = vpop.f32.mrb[0].mxu0
        %v740 = vadd.f32 %v643, %v739
        %v741 = vpop.f32.mrb[0].mxu0
        %742 = vmatprep.mubr.f32.mxu0 0.0
        %743 = vmatmul.mubr.f32.gmra.mrb[0].mxu0 %v663
        %v744 = vpop.f32.mrb[0].mxu0
        %v745 = vadd.f32 %v648, %v744
        %v746 = vpop.f32.mrb[0].mxu0
        %747 = vmatprep.mubr.f32.mxu0 0.0
        %748 = vmatmul.mubr.f32.gmra.mrb[0].mxu0 %v666
        %v749 = vpop.f32.mrb[0].mxu0
        %v750 = vadd.f32 %v653, %v749
        %v751 = vpop.f32.mrb[0].mxu0
        %752 = vdwg.mxu0
        %v753 = vadd.f32 %v348, %v735
        %v754 = vadd.f32 %v349, %v740
        %v755 = vadd.f32 %v350, %v745
        %v756 = vadd.f32 %v351, %v750
        %757 = vst [vmem:[%s338] sm:$0xff] %v753
        %758 = vst [vmem:[%s338 + $0x8] sm:$0xff] %v754
        %759 = vst [vmem:[%s338 + $0x10] sm:$0xff] %v755
        %760 = vst [vmem:[%s338 + $0x18] sm:$0xff] %v756
        %s761 = sand.u32 %s182, 1
        %s762 = scalar_lea.sflag [#allocation4], %s761
        %s763 = sand.u32 %s182, 1
        %s764 = smul.addr %s763, 32
        %s765 = scalar_lea.vmem [#allocation3], %s764
        // Predicated region
        $region83: #{tpu_custom_call.1} parent=77 // pred_check
          %p766 = pneg %p192
        $region84: #{tpu_custom_call.1} parent=77 // pred_check_branch
          %768 = sbr.rel (%p766) target = $region86
        $region85: #{tpu_custom_call.1} parent=77 // pred_region
          %s770 = ssub.s32 512, 512
          %771 = vsyncadd %s762, %s770
          %s772 = smul.addr %s24, 8
          %s773 = sadd.s32 %s25, %s772
          %s774 = smul.addr %s773, 128
          %s775 = scalar_lea.hbm %s6, %s774
          %s776 = sshll.u32 %s765, 4
          %s777 = int_to_ptr.vmem [resolvable:$true] %s776
          %782 = dma.vmem_to_hbm [thread:$0]  %s777, 512, %s775, %s762, 128, 256, 8
        $region86: #{tpu_custom_call.1} parent=77 // pred_fallthru
          _
      $region78: #{tpu_custom_call.1} parent=5 // pred_fallthru
        _
      %p783 = scmp.le.s32.totalorder 2, %s15
      // Predicated region
      $region87: #{tpu_custom_call.1} parent=5 // pred_check
        %p784 = pneg %p783
      $region88: #{tpu_custom_call.1} parent=5 // pred_check_branch
        %786 = sbr.rel (%p784) target = $region90
      $region89: #{tpu_custom_call.1} parent=5 // pred_region
        %s787 = ssub.s32 %s15, 2
        // Predicated region
        $region91: #{tpu_custom_call.1} parent=89 // pred_check
          %p788 = pneg %p198
        $region92: #{tpu_custom_call.1} parent=89 // pred_check_branch
          %790 = sbr.rel (%p788) target = $region94
        $region93: #{tpu_custom_call.1} parent=89 // pred_region
          %s791 = sand.u32 %s183, 1
          %s792 = scalar_lea.sflag [#allocation4], %s791
          %s793 = sand.u32 %s183, 1
          %s794 = smul.addr %s793, 32
          %s795 = scalar_lea.vmem [#allocation3], %s794
          %796 = dma.done %s792, 512
        $region94: #{tpu_custom_call.1} parent=89 // pred_fallthru
          _
      $region90: #{tpu_custom_call.1} parent=5 // pred_fallthru
        _
    $region6: #{tpu_custom_call.1} parent=1 // loop_footer
      %s19 = sadd.s32 1, %s15
    $region7: #{tpu_custom_call.1} parent=1 // loop_footer_branch
      %14 = sbr.rel target = $region3
    $region8: #{tpu_custom_call.1} parent=1 // loop_exit
      _
    %797 = vsyncpa [#allocation4], 1
    %s798 = scalar_lea.sflag [#allocation4], 1
    %799 = vsyncpa %s798, 1

</llo_original>
